<compile_context>
chip_gen: v7x
topology: tpu7x:2x2x1
jax: 0.10.0
libtpu: 0.0.40
codegen_flags: <defaults>
</compile_context>

<pallas_src>
import math

import jax
import jax.numpy as jnp
from jax.experimental import pallas as pl
from jax.experimental.pallas import tpu as pltpu


def _round_up(x, m):
    return (x + m - 1) // m * m


# ---------------------------------------------------------------------------
# Kernel 1: tiled (im2col-matmul + bias + LeakyReLU) for one Conv2d layer
# ---------------------------------------------------------------------------
def _matmul_bias_lrelu_kernel(a_ref, w_ref, b_ref, o_ref):
    acc = jnp.dot(a_ref[...], w_ref[...], preferred_element_type=jnp.float32)
    acc = acc + b_ref[...]                       # (tm, N) + (1, N), f32
    acc = jnp.where(acc > 0, acc, 0.2 * acc)     # LeakyReLU(0.2) in f32
    o_ref[...] = acc.astype(o_ref.dtype)


def matmul_bias_lrelu(a, w, b, *, out_dtype=jnp.bfloat16, tm_max=512):
    """a: (M, K) bf16, w: (K, N) bf16, b: (1, N) f32  ->  (M, N) out_dtype."""
    M, K = a.shape
    _, N = w.shape

    tm = min(tm_max, _round_up(M, 8))
    M_pad = _round_up(M, tm)
    if M_pad != M:
        a = jnp.pad(a, ((0, M_pad - M), (0, 0)))
    grid = (M_pad // tm,)

    itm = jnp.dtype(out_dtype).itemsize
    cost = pl.CostEstimate(
        flops=2 * M_pad * K * N,
        transcendentals=0,
        bytes_accessed=M_pad * K * 2 + K * N * 2 + N * 4 + M_pad * N * itm,
    )

    out = pl.pallas_call(
        _matmul_bias_lrelu_kernel,
        out_shape=jax.ShapeDtypeStruct((M_pad, N), out_dtype),
        grid=grid,
        in_specs=[
            pl.BlockSpec((tm, K), lambda i: (i, 0)),   # streamed A tiles
            pl.BlockSpec((K, N), lambda i: (0, 0)),    # resident weight
            pl.BlockSpec((1, N), lambda i: (0, 0)),    # resident bias
        ],
        out_specs=pl.BlockSpec((tm, N), lambda i: (i, 0)),
        compiler_params=pltpu.CompilerParams(
            dimension_semantics=("parallel",),
            vmem_limit_bytes=48 * 1024 * 1024,
        ),
        cost_estimate=cost,
    )(a, w, b)

    return out[:M] if M_pad != M else out


def conv2d_k4_s2_p1_lrelu(x_nhwc, w_torch, b):
    """Conv2d(kernel=(4,4), stride=2, padding=1) + LeakyReLU(0.2), NHWC in/out."""
    B, H, W, C = x_nhwc.shape
    C_out = w_torch.shape[0]
    H_out = (H + 2 - 4) // 2 + 1
    W_out = (W + 2 - 4) // 2 + 1

    x_pad = jnp.pad(x_nhwc, ((0, 0), (1, 1), (1, 1), (0, 0)))
    # im2col with K ordered (p, q, C): every slab keeps C (lane-dense) innermost.
    slabs = []
    for p in range(4):
        for q in range(4):
            slabs.append(x_pad[:, p:p + 2 * H_out:2, q:q + 2 * W_out:2, :])
    pat = jnp.stack(slabs, axis=3)                         # (B, Ho, Wo, 16, C)
    A = pat.reshape(B * H_out * W_out, 16 * C)             # K-index = (p*4+q)*C + c

    # PyTorch weight (C_out, C_in, 4, 4) -> (4, 4, C_in, C_out) -> (16*C_in, C_out)
    Wm = jnp.transpose(w_torch, (2, 3, 1, 0)).reshape(16 * C, C_out)

    # Pad K up to a multiple of 128 for unmasked 128-lane loads / full MXU tiles.
    K = 16 * C
    K_pad = _round_up(K, 128)
    if K_pad != K:
        A = jnp.pad(A, ((0, 0), (0, K_pad - K)))
        Wm = jnp.pad(Wm, ((0, K_pad - K), (0, 0)))

    out = matmul_bias_lrelu(
        A.astype(jnp.bfloat16),
        Wm.astype(jnp.bfloat16),
        b.reshape(1, C_out).astype(jnp.float32),
    )
    return out.reshape(B, H_out, W_out, C_out)             # stays NHWC


# ---------------------------------------------------------------------------
# Kernel 2: AdaptiveAvgPool2d(1) + FC head (256->128->10->1, lane-padded) + Sigmoid
# ---------------------------------------------------------------------------
def _head_kernel(feat_ref, w1_ref, b1_ref, w2_ref, b2_ref, w3_ref, b3_ref, o_ref):
    feat = feat_ref[...].astype(jnp.float32)               # (B, S, 256)
    pooled = jnp.mean(feat, axis=1)                        # (B, 256) == AdaptiveAvgPool2d(1)

    h = jnp.dot(pooled.astype(jnp.bfloat16), w1_ref[...],
                preferred_element_type=jnp.float32) + b1_ref[...]
    h = jnp.where(h > 0, h, 0.2 * h)                       # (B, 128)

    h = jnp.dot(h.astype(jnp.bfloat16), w2_ref[...],
                preferred_element_type=jnp.float32) + b2_ref[...]
    h = jnp.where(h > 0, h, 0.2 * h)                       # (B, 128); lanes >= 10 are exactly 0

    # Linear(10 -> 1) as broadcast-multiply + lane reduction over the padded 128 lanes.
    z = jnp.sum(h * w3_ref[...], axis=-1, keepdims=True) + b3_ref[0, 0]
    o_ref[...] = jax.nn.sigmoid(z)


def pool_fc_head(feat, w1, b1, w2, b2, w3, b3):
    B, S, C = feat.shape
    # Zero-pad the 10-wide fc2/fc3 up to 128 lanes (LeakyReLU(0)=0 keeps this exact).
    pad = 128 - w2.shape[1]
    w2p = jnp.pad(w2, ((0, 0), (0, pad))).astype(jnp.bfloat16)   # (128, 128)
    b2p = jnp.pad(b2, ((0, 0), (0, pad)))                        # (1, 128)
    w3p = jnp.pad(w3, ((0, 0), (0, pad)))                        # (1, 128)

    return pl.pallas_call(
        _head_kernel,
        out_shape=jax.ShapeDtypeStruct((B, 1), jnp.float32),
        grid=(1,),
        in_specs=[
            pl.BlockSpec((B, S, C), lambda i: (0, 0, 0)),
            pl.BlockSpec((256, 128), lambda i: (0, 0)),
            pl.BlockSpec((1, 128), lambda i: (0, 0)),
            pl.BlockSpec((128, 128), lambda i: (0, 0)),
            pl.BlockSpec((1, 128), lambda i: (0, 0)),
            pl.BlockSpec((1, 128), lambda i: (0, 0)),
            pl.BlockSpec(memory_space=pltpu.MemorySpace.SMEM),   # b3 scalar
        ],
        out_specs=pl.BlockSpec((B, 1), lambda i: (0, 0)),
    )(feat, w1.astype(jnp.bfloat16), b1, w2p, b2p, w3p, b3)


# ---------------------------------------------------------------------------
# Parameter init (deterministic, PyTorch-default-like uniform bounds)
# ---------------------------------------------------------------------------
def _uniform(key, shape, fan_in):
    bound = 1.0 / math.sqrt(fan_in)
    return jax.random.uniform(key, shape, jnp.float32, -bound, bound)


def init_params(key, input_channels):
    ks = jax.random.split(key, 12)
    p = {}
    fan = input_channels * 16
    p["c1_w"] = _uniform(ks[0], (256, input_channels, 4, 4), fan)
    p["c1_b"] = _uniform(ks[1], (256,), fan)
    fan = 256 * 16
    p["c2_w"] = _uniform(ks[2], (256, 256, 4, 4), fan)
    p["c2_b"] = _uniform(ks[3], (256,), fan)
    p["c3_w"] = _uniform(ks[4], (256, 256, 4, 4), fan)
    p["c3_b"] = _uniform(ks[5], (256,), fan)
    # fc layers stored as (in, out) so the kernel does x @ W
    p["fc1_w"] = _uniform(ks[6], (256, 128), 256)
    p["fc1_b"] = _uniform(ks[7], (1, 128), 256)
    p["fc2_w"] = _uniform(ks[8], (128, 10), 128)
    p["fc2_b"] = _uniform(ks[9], (1, 10), 128)
    p["fc3_w"] = _uniform(ks[10], (1, 10), 10)   # PyTorch weight (out=1, in=10)
    p["fc3_b"] = _uniform(ks[11], (1, 1), 10)
    return p


# ---------------------------------------------------------------------------
# Full forward pass
# ---------------------------------------------------------------------------
def discriminator2d_forward(params, x, input_channels, in_samples):
    B = x.shape[0]
    # Flatten(1,-1) -> Unflatten(1,(C,S)) -> Unflatten(2,(S//16,16))
    x = x.reshape(B, -1).reshape(B, input_channels, in_samples // 16, 16)
    # One tiny NCHW -> NHWC transpose at the very start; everything else stays NHWC.
    x = jnp.transpose(x, (0, 2, 3, 1)).astype(jnp.bfloat16)

    x = conv2d_k4_s2_p1_lrelu(x, params["c1_w"], params["c1_b"])
    x = conv2d_k4_s2_p1_lrelu(x, params["c2_w"], params["c2_b"])
    x = conv2d_k4_s2_p1_lrelu(x, params["c3_w"], params["c3_b"])

    # TODO(synk): AdaptiveAvgPool could be folded into conv3's M-tile stream, but the
    # conv3 output is the smallest intermediate so it stays in the (tiny) head kernel.
    B2, H3, W3, C = x.shape
    feat = x.reshape(B2, H3 * W3, C)            # already (B, S, 256); no transpose needed
    return pool_fc_head(
        feat,
        params["fc1_w"], params["fc1_b"],
        params["fc2_w"], params["fc2_b"],
        params["fc3_w"], params["fc3_b"],
    )


if __name__ == "__main__":
    input_channels = 4
    in_samples = 128            # must be divisible by 16 (small analogue of 2000)
    batch = 2

    root = jax.random.PRNGKey(0)
    k_params, k_x = jax.random.split(root)
    params = init_params(k_params, input_channels)
    x = jax.random.normal(k_x, (batch, input_channels, in_samples), jnp.float32)

    out = discriminator2d_forward(params, x, input_channels, in_samples)
    out = jax.block_until_ready(out)

    assert out.shape == (batch, 1), out.shape
    assert jnp.all(out > 0.0) and jnp.all(out < 1.0)
    assert jnp.all(jnp.isfinite(out))
    print("KERNEL_OK")
</pallas_src>

<mosaic_0001>
module attributes {stable_mosaic.version = 11 : i64} {
  func.func @_matmul_bias_lrelu_kernel(%arg0: i32, %arg1: memref<64x128xbf16, #tpu.memory_space<vmem>>, %arg2: memref<128x256xbf16, #tpu.memory_space<vmem>>, %arg3: memref<1x256xf32, #tpu.memory_space<vmem>>, %arg4: memref<64x256xbf16, #tpu.memory_space<vmem>>) attributes {dimension_semantics = [#tpu.dimension_semantics<parallel>], iteration_bounds = array<i64: 1>, scalar_prefetch = 0 : i64, scratch_operands = 0 : i64, tpu.core_type = #tpu.core_type<tc>, window_params = [{transform_indices = @transform_0, window_bounds = array<i64: 64, 128>}, {pipeline_mode = #tpu.pipeline_mode<synchronous>, transform_indices = @transform_1, window_bounds = array<i64: 128, 256>}, {pipeline_mode = #tpu.pipeline_mode<synchronous>, transform_indices = @transform_2, window_bounds = array<i64: 1, 256>}, {transform_indices = @transform_3, window_bounds = array<i64: 64, 256>}]} {
    %c0 = arith.constant 0 : index
    %c0_0 = arith.constant 0 : index
    %0 = vector.load %arg1[%c0, %c0_0] : memref<64x128xbf16, #tpu.memory_space<vmem>>, vector<64x128xbf16>
    %c0_1 = arith.constant 0 : index
    %c0_2 = arith.constant 0 : index
    %1 = vector.load %arg2[%c0_1, %c0_2] : memref<128x256xbf16, #tpu.memory_space<vmem>>, vector<128x256xbf16>
    %cst = arith.constant dense<0.000000e+00> : vector<64x256xf32>
    %2 = tpu.matmul %0, %1, %cst {dimension_numbers = #tpu.dot_dimension_numbers<[1], [0], [0], [1], [0, 0, 1, 1], [], []>} : vector<64x128xbf16>, vector<128x256xbf16>, vector<64x256xf32> -> vector<64x256xf32>
    %c0_3 = arith.constant 0 : index
    %c0_4 = arith.constant 0 : index
    %3 = vector.load %arg3[%c0_3, %c0_4] : memref<1x256xf32, #tpu.memory_space<vmem>>, vector<1x256xf32>
    %4 = vector.broadcast %3 : vector<1x256xf32> to vector<64x256xf32>
    %5 = arith.addf %2, %4 : vector<64x256xf32>
    %cst_5 = arith.constant 0.000000e+00 : f32
    %6 = vector.broadcast %cst_5 : f32 to vector<64x256xf32>
    %7 = arith.cmpf ogt, %5, %6 : vector<64x256xf32>
    %cst_6 = arith.constant 2.000000e-01 : f32
    %8 = vector.broadcast %cst_6 : f32 to vector<64x256xf32>
    %9 = arith.mulf %8, %5 : vector<64x256xf32>
    %10 = arith.select %7, %5, %9 : vector<64x256xi1>, vector<64x256xf32>
    %11 = arith.truncf %10 : vector<64x256xf32> to vector<64x256xbf16>
    %c0_7 = arith.constant 0 : index
    %c0_8 = arith.constant 0 : index
    %12 = vector.load %arg4[%c0_7, %c0_8] : memref<64x256xbf16, #tpu.memory_space<vmem>>, vector<64x256xbf16>
    tpu.vector_store %arg4[%c0_7, %c0_8], %11 {strides = array<i32>} : memref<64x256xbf16, #tpu.memory_space<vmem>>, vector<64x256xbf16>,
    return
  }
  func.func @transform_0(%arg0: i32) -> (i32, i32) {
    %c0_i32 = arith.constant 0 : i32
    %c0_i32_0 = arith.constant 0 : i32
    return %arg0, %c0_i32 : i32, i32
  }
  func.func @transform_1(%arg0: i32) -> (i32, i32) {
    %c0_i32 = arith.constant 0 : i32
    %c0_i32_0 = arith.constant 0 : i32
    %c0_i32_1 = arith.constant 0 : i32
    return %c0_i32, %c0_i32_0 : i32, i32
  }
  func.func @transform_2(%arg0: i32) -> (i32, i32) {
    %c0_i32 = arith.constant 0 : i32
    %c0_i32_0 = arith.constant 0 : i32
    %c0_i32_1 = arith.constant 0 : i32
    return %c0_i32, %c0_i32_0 : i32, i32
  }
  func.func @transform_3(%arg0: i32) -> (i32, i32) {
    %c0_i32 = arith.constant 0 : i32
    %c0_i32_0 = arith.constant 0 : i32
    return %arg0, %c0_i32 : i32, i32
  }
}

</mosaic_0001>

<llo_original>
// kernel: tpu_custom_call.1
$region0: #{tpu_custom_call.1}
  #allocation0 [shape = 'u32[]', space=smem, size = 0x4, offset = 0x4, fixed_abs, tag = 'smem constant byte address 0x4 - core index']
  #allocation1 [shape = 'u32[144,128]{1,0:T(1,128)}', space=vmem, size = 0x12000, scoped, tag = 'internal scratch']
  %s0 = inlined_call_operand.hbm [shape: bf16[64,128], index: 0, kind: input, shape index: {}]
  %s1 = inlined_call_operand.hbm [shape: bf16[128,256], index: 1, kind: input, shape index: {}]
  %s2 = inlined_call_operand.vmem [shape: f32[1,256], index: 2, kind: input, shape index: {}]
  %s3 = inlined_call_operand.hbm [shape: bf16[64,256], index: 3, kind: output, shape index: {}]
  %s4 = sld [smem:[#allocation0]]
  $region30: #{tpu_custom_call.1} parent=0
    _
  %s6 = ssub.s32 1, %s4
  %s7 = scalar_select 0, %s6, %s4
  $region1: #{tpu_custom_call.1} parent=0
    #allocation2 [shape = 'u8[16384]{0}', space=vmem, size = 0x4000, scoped, tag = 'input window, operand 0, single buffered']
    #allocation3 [shape = 's32[1]{0}', space=sflag, size = 0x4, scoped, tag = 'scoped memory for tpu_custom_call.1']
    #allocation4 [shape = 's32[1]{0}', space=sflag, size = 0x4, scoped, tag = 'scoped memory for tpu_custom_call.1']
    #allocation5 [shape = 'u8[65536]{0}', space=vmem, size = 0x10000, scoped, tag = 'input window, operand 1, single buffered']
    #allocation6 [shape = 's32[1]{0}', space=sflag, size = 0x4, scoped, tag = 'scoped memory for tpu_custom_call.1']
    #allocation7 [shape = 'u8[32768]{0}', space=vmem, size = 0x8000, scoped, tag = 'output window, operand 0, single buffered']
    %8 = vsyncpa [#allocation3], 0
    %9 = vsyncpa [#allocation6], 0
    %10 = vsyncpa [#allocation4], 0
    // Predicated region
    $region2: #{tpu_custom_call.1} parent=1 // pred_check
      _
    $region3: #{tpu_custom_call.1} parent=1 // pred_check_branch
      %12 = sbr.rel (0) target = $region5
    $region4: #{tpu_custom_call.1} parent=1 // pred_region
      %s14 = ssub.s32 512, 512
      %15 = vsyncadd [#allocation3], %s14
      %s16 = sshll.u32 [#allocation2], 4
      %s17 = int_to_ptr.vmem [resolvable:$true] %s16
      %22 = dma.hbm_to_vmem [thread:$0]  %s0, 512, %s17, [#allocation3], 64, 64, 4
    $region5: #{tpu_custom_call.1} parent=1 // pred_fallthru
      _
    // Predicated region
    $region6: #{tpu_custom_call.1} parent=1 // pred_check
      _
    $region7: #{tpu_custom_call.1} parent=1 // pred_check_branch
      %24 = sbr.rel (0) target = $region9
    $region8: #{tpu_custom_call.1} parent=1 // pred_region
      %s26 = ssub.s32 2048, 2048
      %27 = vsyncadd [#allocation6], %s26
      %s28 = sshll.u32 [#allocation5], 4
      %s29 = int_to_ptr.vmem [resolvable:$true] %s28
      %34 = dma.hbm_to_vmem [thread:$0]  %s1, 2048, %s29, [#allocation6], 128, 128, 8
    $region9: #{tpu_custom_call.1} parent=1 // pred_fallthru
      _
    // Predicated region
    $region10: #{tpu_custom_call.1} parent=1 // pred_check
      _
    $region11: #{tpu_custom_call.1} parent=1 // pred_check_branch
      %36 = sbr.rel (0) target = $region13
    $region12: #{tpu_custom_call.1} parent=1 // pred_region
      _
    $region13: #{tpu_custom_call.1} parent=1 // pred_fallthru
      _
    // Predicated region
    $region14: #{tpu_custom_call.1} parent=1 // pred_check
      _
    $region15: #{tpu_custom_call.1} parent=1 // pred_check_branch
      %38 = sbr.rel (0) target = $region17
    $region16: #{tpu_custom_call.1} parent=1 // pred_region
      %39 = dma.done [#allocation3], 512
    $region17: #{tpu_custom_call.1} parent=1 // pred_fallthru
      _
    // Predicated region
    $region18: #{tpu_custom_call.1} parent=1 // pred_check
      _
    $region19: #{tpu_custom_call.1} parent=1 // pred_check_branch
      %41 = sbr.rel (0) target = $region21
    $region20: #{tpu_custom_call.1} parent=1 // pred_region
      %42 = dma.done [#allocation6], 2048
    $region21: #{tpu_custom_call.1} parent=1 // pred_fallthru
      _
    %v44 = vld [vmem:[#allocation2] sm:$0xf]
    %v45 = vld [vmem:[#allocation2 + $0x4] sm:$0xf]
    %v46 = vld [vmem:[#allocation2 + $0x8] sm:$0xf]
    %v47 = vld [vmem:[#allocation2 + $0xc] sm:$0xf]
    %v48 = vld [vmem:[#allocation2 + $0x10] sm:$0xf]
    %v49 = vld [vmem:[#allocation2 + $0x14] sm:$0xf]
    %v50 = vld [vmem:[#allocation2 + $0x18] sm:$0xf]
    %v51 = vld [vmem:[#allocation2 + $0x1c] sm:$0xf]
    %v52 = vld [vmem:[#allocation5] sm:$0xff]
    %v53 = vld [vmem:[#allocation5 + $0x8] sm:$0xff]
    %v54 = vld [vmem:[#allocation5 + $0x10] sm:$0xff]
    %v55 = vld [vmem:[#allocation5 + $0x18] sm:$0xff]
    %v56 = vld [vmem:[#allocation5 + $0x20] sm:$0xff]
    %v57 = vld [vmem:[#allocation5 + $0x28] sm:$0xff]
    %v58 = vld [vmem:[#allocation5 + $0x30] sm:$0xff]
    %v59 = vld [vmem:[#allocation5 + $0x38] sm:$0xff]
    %v60 = vld [vmem:[#allocation5 + $0x40] sm:$0xff]
    %v61 = vld [vmem:[#allocation5 + $0x48] sm:$0xff]
    %v62 = vld [vmem:[#allocation5 + $0x50] sm:$0xff]
    %v63 = vld [vmem:[#allocation5 + $0x58] sm:$0xff]
    %v64 = vld [vmem:[#allocation5 + $0x60] sm:$0xff]
    %v65 = vld [vmem:[#allocation5 + $0x68] sm:$0xff]
    %v66 = vld [vmem:[#allocation5 + $0x70] sm:$0xff]
    %v67 = vld [vmem:[#allocation5 + $0x78] sm:$0xff]
    %v68 = vld [vmem:[%s2] sm:$0x3]
    %v70 = vlaneseq
    %v71 = vshrl.u32 %v70, 7
    %v72 = vsub.s32 0, %v71
    %v73 = vrot.slane %v68, %v72
    %v74 = vlaneseq
    %v75 = vshrl.u32 %v74, 7
    %v76 = vsub.s32 1, %v75
    %v77 = vrot.slane %v68, %v76
    %v88 = vunpack.c.l.b16 %v44
    %v89 = vunpack.c.l.b16 %v45
    %v90 = vunpack.c.l.b16 %v46
    %v91 = vunpack.c.l.b16 %v47
    %v92 = vunpack.c.l.b16 %v48
    %v93 = vunpack.c.l.b16 %v49
    %v94 = vunpack.c.l.b16 %v50
    %v95 = vunpack.c.l.b16 %v51
    %v96 = vpack.c.b16 %v89, %v88
    %v97 = vpack.c.b16 %v91, %v90
    %v98 = vpack.c.b16 %v93, %v92
    %v99 = vpack.c.b16 %v95, %v94
    %v120 = vunpack.c.l.b16 %v52
    %v121 = vunpack.c.h.b16 %v52
    %v122 = vunpack.c.l.b16 %v53
    %v123 = vunpack.c.h.b16 %v53
    %v124 = vunpack.c.l.b16 %v54
    %v125 = vunpack.c.h.b16 %v54
    %v126 = vunpack.c.l.b16 %v55
    %v127 = vunpack.c.h.b16 %v55
    %v128 = vunpack.c.l.b16 %v56
    %v129 = vunpack.c.h.b16 %v56
    %v130 = vunpack.c.l.b16 %v57
    %v131 = vunpack.c.h.b16 %v57
    %v132 = vunpack.c.l.b16 %v58
    %v133 = vunpack.c.h.b16 %v58
    %v134 = vunpack.c.l.b16 %v59
    %v135 = vunpack.c.h.b16 %v59
    %v136 = vunpack.c.l.b16 %v60
    %v137 = vunpack.c.h.b16 %v60
    %v138 = vunpack.c.l.b16 %v61
    %v139 = vunpack.c.h.b16 %v61
    %v140 = vunpack.c.l.b16 %v62
    %v141 = vunpack.c.h.b16 %v62
    %v142 = vunpack.c.l.b16 %v63
    %v143 = vunpack.c.h.b16 %v63
    %v144 = vunpack.c.l.b16 %v64
    %v145 = vunpack.c.h.b16 %v64
    %v146 = vunpack.c.l.b16 %v65
    %v147 = vunpack.c.h.b16 %v65
    %v148 = vunpack.c.l.b16 %v66
    %v149 = vunpack.c.h.b16 %v66
    %v150 = vunpack.c.l.b16 %v67
    %v151 = vunpack.c.h.b16 %v67
    %v152 = vpack.c.b16 %v122, %v120
    %v153 = vpack.c.b16 %v123, %v121
    %v154 = vpack.c.b16 %v126, %v124
    %v155 = vpack.c.b16 %v127, %v125
    %v156 = vpack.c.b16 %v130, %v128
    %v157 = vpack.c.b16 %v131, %v129
    %v158 = vpack.c.b16 %v134, %v132
    %v159 = vpack.c.b16 %v135, %v133
    %v160 = vpack.c.b16 %v138, %v136
    %v161 = vpack.c.b16 %v139, %v137
    %v162 = vpack.c.b16 %v142, %v140
    %v163 = vpack.c.b16 %v143, %v141
    %v164 = vpack.c.b16 %v146, %v144
    %v165 = vpack.c.b16 %v147, %v145
    %v166 = vpack.c.b16 %v150, %v148
    %v167 = vpack.c.b16 %v151, %v149
    %184 = vmatprep.subr.bf16.mxu0 %v153
    %185 = vmatpush1.bf16.msra.mxu0 %v152
    %186 = vmatprep.subr.bf16.mxu0 %v155
    %187 = vmatpush1.bf16.msra.mxu0 %v154
    %188 = vmatprep.subr.bf16.mxu0 %v157
    %189 = vmatpush1.bf16.msra.mxu0 %v156
    %190 = vmatprep.subr.bf16.mxu0 %v159
    %191 = vmatpush1.bf16.msra.mxu0 %v158
    %192 = vmatprep.subr.bf16.mxu0 %v161
    %193 = vmatpush1.bf16.msra.mxu0 %v160
    %194 = vmatprep.subr.bf16.mxu0 %v163
    %195 = vmatpush1.bf16.msra.mxu0 %v162
    %196 = vmatprep.subr.bf16.mxu0 %v165
    %197 = vmatpush1.bf16.msra.mxu0 %v164
    %198 = vmatprep.subr.bf16.mxu0 %v167
    %199 = vmatpush1.bf16.msra.mxu0 %v166
    %200 = vmatprep.subr.bf16.mxu0 0
    %201 = vmatpush1.bf16.msra.mxu0 0
    %202 = vmatprep.subr.bf16.mxu0 0
    %203 = vmatpush1.bf16.msra.mxu0 0
    %204 = vmatprep.subr.bf16.mxu0 0
    %205 = vmatpush1.bf16.msra.mxu0 0
    %206 = vmatprep.subr.bf16.mxu0 0
    %207 = vmatpush1.bf16.msra.mxu0 0
    %208 = vmatprep.subr.bf16.mxu0 0
    %209 = vmatpush1.bf16.msra.mxu0 0
    %210 = vmatprep.subr.bf16.mxu0 0
    %211 = vmatpush1.bf16.msra.mxu0 0
    %212 = vmatprep.subr.bf16.mxu0 0
    %213 = vmatpush1.bf16.msra.mxu0 0
    %214 = vmatprep.subr.bf16.mxu0 0
    %215 = vmatpush1.bf16.msra.mxu0 0
    %216 = vmatprep.mubr.bf16.mxu0 0
    %217 = vmatmul.mubr.bf16.gmra.mrb[0].mxu0 %v96
    %v218 = vpop.f32.mrb[0].mxu0
    %v219 = vadd.f32 %v73, %v218
    %v220 = vpop.f32.mrb[0].mxu0
    %v221 = vadd.f32 %v77, %v220
    %v222 = vpop.f32.mrb[0].mxu0
    %v223 = vadd.f32 %v73, %v222
    %v224 = vpop.f32.mrb[0].mxu0
    %v225 = vadd.f32 %v77, %v224
    %226 = vmatprep.mubr.bf16.mxu0 0
    %227 = vmatmul.mubr.bf16.gmra.mrb[0].mxu0 %v97
    %v228 = vpop.f32.mrb[0].mxu0
    %v229 = vadd.f32 %v73, %v228
    %v230 = vpop.f32.mrb[0].mxu0
    %v231 = vadd.f32 %v77, %v230
    %v232 = vpop.f32.mrb[0].mxu0
    %v233 = vadd.f32 %v73, %v232
    %v234 = vpop.f32.mrb[0].mxu0
    %v235 = vadd.f32 %v77, %v234
    %236 = vmatprep.mubr.bf16.mxu0 0
    %237 = vmatmul.mubr.bf16.gmra.mrb[0].mxu0 %v98
    %v238 = vpop.f32.mrb[0].mxu0
    %v239 = vadd.f32 %v73, %v238
    %v240 = vpop.f32.mrb[0].mxu0
    %v241 = vadd.f32 %v77, %v240
    %v242 = vpop.f32.mrb[0].mxu0
    %v243 = vadd.f32 %v73, %v242
    %v244 = vpop.f32.mrb[0].mxu0
    %v245 = vadd.f32 %v77, %v244
    %246 = vmatprep.mubr.bf16.mxu0 0
    %247 = vmatmul.mubr.bf16.gmra.mrb[0].mxu0 %v99
    %v248 = vpop.f32.mrb[0].mxu0
    %v249 = vadd.f32 %v73, %v248
    %v250 = vpop.f32.mrb[0].mxu0
    %v251 = vadd.f32 %v77, %v250
    %v252 = vpop.f32.mrb[0].mxu0
    %v253 = vadd.f32 %v73, %v252
    %v254 = vpop.f32.mrb[0].mxu0
    %v255 = vadd.f32 %v77, %v254
    %256 = vdwg.mxu0
    %vm257 = vcmp.gt.f32.partialorder %v219, 0.0
    %vm258 = vcmp.gt.f32.partialorder %v221, 0.0
    %vm259 = vcmp.gt.f32.partialorder %v223, 0.0
    %vm260 = vcmp.gt.f32.partialorder %v225, 0.0
    %vm261 = vcmp.gt.f32.partialorder %v229, 0.0
    %vm262 = vcmp.gt.f32.partialorder %v231, 0.0
    %vm263 = vcmp.gt.f32.partialorder %v233, 0.0
    %vm264 = vcmp.gt.f32.partialorder %v235, 0.0
    %vm265 = vcmp.gt.f32.partialorder %v239, 0.0
    %vm266 = vcmp.gt.f32.partialorder %v241, 0.0
    %vm267 = vcmp.gt.f32.partialorder %v243, 0.0
    %vm268 = vcmp.gt.f32.partialorder %v245, 0.0
    %vm269 = vcmp.gt.f32.partialorder %v249, 0.0
    %vm270 = vcmp.gt.f32.partialorder %v251, 0.0
    %vm271 = vcmp.gt.f32.partialorder %v253, 0.0
    %vm272 = vcmp.gt.f32.partialorder %v255, 0.0
    %v273 = vmul.f32 %v219, 0.2
    %v274 = vmul.f32 %v221, 0.2
    %v275 = vmul.f32 %v223, 0.2
    %v276 = vmul.f32 %v225, 0.2
    %v277 = vmul.f32 %v229, 0.2
    %v278 = vmul.f32 %v231, 0.2
    %v279 = vmul.f32 %v233, 0.2
    %v280 = vmul.f32 %v235, 0.2
    %v281 = vmul.f32 %v239, 0.2
    %v282 = vmul.f32 %v241, 0.2
    %v283 = vmul.f32 %v243, 0.2
    %v284 = vmul.f32 %v245, 0.2
    %v285 = vmul.f32 %v249, 0.2
    %v286 = vmul.f32 %v251, 0.2
    %v287 = vmul.f32 %v253, 0.2
    %v288 = vmul.f32 %v255, 0.2
    %v289 = vsel %vm257, %v219, %v273
    %v290 = vsel %vm258, %v221, %v274
    %v291 = vsel %vm259, %v223, %v275
    %v292 = vsel %vm260, %v225, %v276
    %v293 = vsel %vm261, %v229, %v277
    %v294 = vsel %vm262, %v231, %v278
    %v295 = vsel %vm263, %v233, %v279
    %v296 = vsel %vm264, %v235, %v280
    %v297 = vsel %vm265, %v239, %v281
    %v298 = vsel %vm266, %v241, %v282
    %v299 = vsel %vm267, %v243, %v283
    %v300 = vsel %vm268, %v245, %v284
    %v301 = vsel %vm269, %v249, %v285
    %v302 = vsel %vm270, %v251, %v286
    %v303 = vsel %vm271, %v253, %v287
    %v304 = vsel %vm272, %v255, %v288
    %v305 = vpack.c.bf16 %v291, %v289
    %v306 = vpack.c.bf16 %v292, %v290
    %v307 = vpack.c.bf16 %v295, %v293
    %v308 = vpack.c.bf16 %v296, %v294
    %v309 = vpack.c.bf16 %v299, %v297
    %v310 = vpack.c.bf16 %v300, %v298
    %v311 = vpack.c.bf16 %v303, %v301
    %v312 = vpack.c.bf16 %v304, %v302
    %v321 = vunpack.c.l.b16 %v305
    %v322 = vunpack.c.l.b16 %v306
    %v323 = vunpack.c.h.b16 %v305
    %v324 = vunpack.c.h.b16 %v306
    %v325 = vunpack.c.l.b16 %v307
    %v326 = vunpack.c.l.b16 %v308
    %v327 = vunpack.c.h.b16 %v307
    %v328 = vunpack.c.h.b16 %v308
    %v329 = vunpack.c.l.b16 %v309
    %v330 = vunpack.c.l.b16 %v310
    %v331 = vunpack.c.h.b16 %v309
    %v332 = vunpack.c.h.b16 %v310
    %v333 = vunpack.c.l.b16 %v311
    %v334 = vunpack.c.l.b16 %v312
    %v335 = vunpack.c.h.b16 %v311
    %v336 = vunpack.c.h.b16 %v312
    %v337 = vpack.c.b16 %v322, %v321
    %v338 = vpack.c.b16 %v324, %v323
    %v339 = vpack.c.b16 %v326, %v325
    %v340 = vpack.c.b16 %v328, %v327
    %v341 = vpack.c.b16 %v330, %v329
    %v342 = vpack.c.b16 %v332, %v331
    %v343 = vpack.c.b16 %v334, %v333
    %v344 = vpack.c.b16 %v336, %v335
    %353 = vst [vmem:[#allocation7] sm:$0xff] %v337
    %354 = vst [vmem:[#allocation7 + $0x8] sm:$0xff] %v338
    %355 = vst [vmem:[#allocation7 + $0x10] sm:$0xff] %v339
    %356 = vst [vmem:[#allocation7 + $0x18] sm:$0xff] %v340
    %357 = vst [vmem:[#allocation7 + $0x20] sm:$0xff] %v341
    %358 = vst [vmem:[#allocation7 + $0x28] sm:$0xff] %v342
    %359 = vst [vmem:[#allocation7 + $0x30] sm:$0xff] %v343
    %360 = vst [vmem:[#allocation7 + $0x38] sm:$0xff] %v344
    // Predicated region
    $region22: #{tpu_custom_call.1} parent=1 // pred_check
      _
    $region23: #{tpu_custom_call.1} parent=1 // pred_check_branch
      %362 = sbr.rel (0) target = $region25
    $region24: #{tpu_custom_call.1} parent=1 // pred_region
      %s364 = ssub.s32 1024, 1024
      %365 = vsyncadd [#allocation4], %s364
      %s366 = sshll.u32 [#allocation7], 4
      %s367 = int_to_ptr.vmem [resolvable:$true] %s366
      %372 = dma.vmem_to_hbm [thread:$0]  %s367, 1024, %s3, [#allocation4], 128, 128, 8
    $region25: #{tpu_custom_call.1} parent=1 // pred_fallthru
      _
    // Predicated region
    $region26: #{tpu_custom_call.1} parent=1 // pred_check
      _
    $region27: #{tpu_custom_call.1} parent=1 // pred_check_branch
      %374 = sbr.rel (0) target = $region29
    $region28: #{tpu_custom_call.1} parent=1 // pred_region
      %375 = dma.done [#allocation4], 1024
    $region29: #{tpu_custom_call.1} parent=1 // pred_fallthru
      _
    %376 = vsyncpa [#allocation3], 1
    %377 = vsyncpa [#allocation6], 1
    %378 = vsyncpa [#allocation4], 1

</llo_original>
